<compile_context>
chip_gen: v7x
topology: tpu7x:2x2x1
jax: 0.10.0
libtpu: 0.0.40
codegen_flags: <defaults>
</compile_context>

<pallas_src>
import jax
import jax.numpy as jnp
from jax.experimental import pallas as pl
from jax.experimental.pallas import tpu as pltpu


def _make_seq_kernel(T, Bp, F, H, mm_dtype):
    """Build the kernel with static (T, Bp, F, H) baked in (loop fully unrolled)."""

    def kernel(xflat_ref, wx_ref, wh_ref, b_ref, wblk_ref, bfc_ref, out_ref):
        # ---- Prologue (off the sequential chain): hoisted input projection.
        # One (T*Bp, F) @ (F, H) f32 matmul replaces T tiny per-step projections.
        pre_x = (jnp.dot(xflat_ref[...], wx_ref[...],
                         preferred_element_type=jnp.float32)
                 + b_ref[...])                                   # (T*Bp, H) f32

        wh = wh_ref[...]                                         # (H, H), mm_dtype (stays MXU-resident)

        # ---- Sequential recurrence, fully unrolled (T is small and static).
        # Only h @ Wh + tanh sit on the critical dependence chain.  The h carry,
        # the pre_t add and the tanh stay f32 (v5e has no bf16 VPU/EUP); only the
        # MXU inputs are cast to mm_dtype.
        h = jnp.zeros((Bp, H), jnp.float32)                      # one full (8,128) vreg
        hs = []
        for t in range(T):                                       # static unroll
            pre_t = pre_x[t * Bp:(t + 1) * Bp, :]                # vreg-aligned static slice
            h = jnp.tanh(
                pre_t + jnp.dot(h.astype(mm_dtype), wh,
                                preferred_element_type=jnp.float32))
            hs.append(h)                                         # kept in vregs

        # ---- Epilogue: fc1 for ALL steps in one matmul, emitted directly in the
        # lane-dense (Bp, T) output layout.  wblk = kron(I_T, W_fc^T) is block-
        # diagonal, so (h_cat @ wblk)[b, t] == h_t[b, :] @ wfc (exact math).
        h_cat = jnp.concatenate(hs, axis=1)                      # (Bp, T*H)
        out_ref[...] = (jnp.dot(h_cat, wblk_ref[...],
                                preferred_element_type=jnp.float32)
                        + bfc_ref[...])                          # single full-block store

    return kernel


def sequence_forward(x, w_i2h, b_i2h, w_fc, b_fc, *, mm_dtype=jnp.bfloat16):
    """x: (T, B, F). w_i2h: (H, F+H), b_i2h: (H,), w_fc: (O, H), b_fc: (O,).

    Returns (B, T), matching torch.stack(outputs, 1).squeeze(2) (requires O == 1).
    mm_dtype: dtype of the recurrent matmul inputs (bf16 = fast path on v6e/v7x,
    f32 = bit-faithful to the reference).  Accumulation is always f32.
    """
    T, B, F = x.shape
    H = w_i2h.shape[0]
    O = w_fc.shape[0]
    assert O == 1, "stack(...,1).squeeze(2) semantics assume output_size == 1"

    SUBLANE = 8
    Bp = max(SUBLANE, ((B + SUBLANE - 1) // SUBLANE) * SUBLANE)  # pad batch to 8 sublanes

    # Split the concat-Linear weight (mathematically exact) and pre-transpose
    # so the kernel computes x @ W (row-major activations).
    wx = jnp.transpose(w_i2h[:, :F]).astype(jnp.float32)         # (F, H)  f32 (off-chain)
    wh = jnp.transpose(w_i2h[:, F:]).astype(mm_dtype)            # (H, H)  MXU input dtype
    b = b_i2h.reshape(1, H).astype(jnp.float32)                  # (1, H)
    wfc = jnp.transpose(w_fc).astype(jnp.float32)                # (H, O)
    # Block-diagonal fc1 weight for the single epilogue matmul: (T*H, T).
    w_blk = jnp.kron(jnp.eye(T, dtype=jnp.float32), wfc)         # (T*H, T*O) == (T*H, T)
    bfc = b_fc.reshape(1, O).astype(jnp.float32)                 # (1, 1)

    # Pad batch rows to Bp and flatten time*batch; padded rows produce values
    # that are simply discarded below.
    x_pad = jnp.zeros((T, Bp, F), jnp.float32).at[:, :B, :].set(x.astype(jnp.float32))
    x_flat = x_pad.reshape(T * Bp, F)                            # (T*Bp, F)

    kernel = _make_seq_kernel(T, Bp, F, H, mm_dtype)

    out = pl.pallas_call(
        kernel,
        out_shape=jax.ShapeDtypeStruct((Bp, T), jnp.float32),
        grid=(1,),                                               # single invocation
        in_specs=[
            pl.BlockSpec((T * Bp, F), lambda i: (0, 0)),         # x (flattened time*batch)
            pl.BlockSpec((F, H), lambda i: (0, 0)),              # Wx
            pl.BlockSpec((H, H), lambda i: (0, 0)),              # Wh
            pl.BlockSpec((1, H), lambda i: (0, 0)),              # b_i2h
            pl.BlockSpec((T * H, T), lambda i: (0, 0)),          # block-diag W_fc
            pl.BlockSpec((1, O), lambda i: (0, 0)),              # b_fc
        ],
        out_specs=pl.BlockSpec((Bp, T), lambda i: (0, 0)),       # lane-dense (Bp, T)
        compiler_params=pltpu.CompilerParams(
            dimension_semantics=("arbitrary",),
        ),
    )(x_flat, wx, wh, b, w_blk, bfc)

    return out[:B, :]                                            # drop padded batch rows


def sequence_ref(x, w_i2h, b_i2h, w_fc, b_fc):
    """Pure-JAX reference (lax.scan) for correctness checking."""
    T, B, F = x.shape
    H = w_i2h.shape[0]
    h0 = jnp.zeros((B, H), jnp.float32)

    def step(h, x_t):
        combined = jnp.concatenate([x_t, h], axis=1)
        h_new = jnp.tanh(combined @ w_i2h.T + b_i2h)
        y = h_new @ w_fc.T + b_fc
        return h_new, y

    _, ys = jax.lax.scan(step, h0, x)        # ys: (T, B, O)
    return jnp.transpose(ys, (1, 0, 2)).squeeze(2)


if __name__ == "__main__":
    # Shapes implied by the module: time-major (T, B, F) input, 1 RnnCell with
    # the default hidden_size=[128], FC to output_size=1.
    T, B, F, H, O = 8, 2, 4, 128, 1

    key = jax.random.PRNGKey(0)
    k_x, k_w1, k_b1, k_w2, k_b2 = jax.random.split(key, 5)

    x = jax.random.normal(k_x, (T, B, F), jnp.float32)
    # nn.Linear(input_size + hidden_size, hidden_size)
    w_i2h = jax.random.normal(k_w1, (H, F + H), jnp.float32) * 0.1
    b_i2h = jax.random.normal(k_b1, (H,), jnp.float32) * 0.1
    # nn.Linear(hidden_size, output_size)
    w_fc = jax.random.normal(k_w2, (O, H), jnp.float32) * 0.1
    b_fc = jax.random.normal(k_b2, (O,), jnp.float32) * 0.1

    ref = sequence_ref(x, w_i2h, b_i2h, w_fc, b_fc)

    # 1) f32 recurrent matmul: bit-faithful path, tight tolerance vs the scan reference.
    out_f32 = jax.block_until_ready(
        sequence_forward(x, w_i2h, b_i2h, w_fc, b_fc, mm_dtype=jnp.float32))
    assert out_f32.shape == (B, T), out_f32.shape
    assert jnp.allclose(out_f32, ref, atol=1e-5, rtol=1e-5), "f32 mismatch vs reference"

    # 2) bf16 MXU inputs on the recurrent matmul (v6e/v7x fast path).  The tanh
    #    recurrence amplifies rounding over T steps, so the tolerance is relaxed.
    out_bf16 = jax.block_until_ready(
        sequence_forward(x, w_i2h, b_i2h, w_fc, b_fc, mm_dtype=jnp.bfloat16))
    assert out_bf16.shape == (B, T), out_bf16.shape
    assert jnp.allclose(out_bf16, ref, atol=1e-1, rtol=1e-1), "bf16 mismatch vs reference"

    print("KERNEL_OK")
</pallas_src>

<mosaic_0001>
module attributes {stable_mosaic.version = 11 : i64} {
  func.func @kernel(%arg0: i32, %arg1: memref<64x4xf32, #tpu.memory_space<vmem>>, %arg2: memref<4x128xf32, #tpu.memory_space<vmem>>, %arg3: memref<128x128xf32, #tpu.memory_space<vmem>>, %arg4: memref<1x128xf32, #tpu.memory_space<vmem>>, %arg5: memref<1024x8xf32, #tpu.memory_space<vmem>>, %arg6: memref<1x1xf32, #tpu.memory_space<vmem>>, %arg7: memref<8x8xf32, #tpu.memory_space<vmem>>) attributes {dimension_semantics = [#tpu.dimension_semantics<arbitrary>], iteration_bounds = array<i64: 1>, scalar_prefetch = 0 : i64, scratch_operands = 0 : i64, tpu.core_type = #tpu.core_type<tc>, window_params = [{pipeline_mode = #tpu.pipeline_mode<synchronous>, transform_indices = @transform_0, window_bounds = array<i64: 64, 4>}, {pipeline_mode = #tpu.pipeline_mode<synchronous>, transform_indices = @transform_1, window_bounds = array<i64: 4, 128>}, {pipeline_mode = #tpu.pipeline_mode<synchronous>, transform_indices = @transform_2, window_bounds = array<i64: 128, 128>}, {pipeline_mode = #tpu.pipeline_mode<synchronous>, transform_indices = @transform_3, window_bounds = array<i64: 1, 128>}, {pipeline_mode = #tpu.pipeline_mode<synchronous>, transform_indices = @transform_4, window_bounds = array<i64: 1024, 8>}, {pipeline_mode = #tpu.pipeline_mode<synchronous>, transform_indices = @transform_5, window_bounds = array<i64: 1, 1>}, {pipeline_mode = #tpu.pipeline_mode<synchronous>, transform_indices = @transform_6, window_bounds = array<i64: 8, 8>}]} {
    %c0 = arith.constant 0 : index
    %c0_0 = arith.constant 0 : index
    %0 = vector.load %arg1[%c0, %c0_0] : memref<64x4xf32, #tpu.memory_space<vmem>>, vector<64x4xf32>
    %c0_1 = arith.constant 0 : index
    %c0_2 = arith.constant 0 : index
    %1 = vector.load %arg2[%c0_1, %c0_2] : memref<4x128xf32, #tpu.memory_space<vmem>>, vector<4x128xf32>
    %cst = arith.constant dense<0.000000e+00> : vector<64x128xf32>
    %2 = tpu.matmul %0, %1, %cst {dimension_numbers = #tpu.dot_dimension_numbers<[1], [0], [0], [1], [0, 0, 1, 1], [], []>} : vector<64x4xf32>, vector<4x128xf32>, vector<64x128xf32> -> vector<64x128xf32>
    %c0_3 = arith.constant 0 : index
    %c0_4 = arith.constant 0 : index
    %3 = vector.load %arg4[%c0_3, %c0_4] : memref<1x128xf32, #tpu.memory_space<vmem>>, vector<1x128xf32>
    %4 = vector.broadcast %3 : vector<1x128xf32> to vector<64x128xf32>
    %5 = arith.addf %2, %4 : vector<64x128xf32>
    %c0_5 = arith.constant 0 : index
    %c0_6 = arith.constant 0 : index
    %6 = vector.load %arg3[%c0_5, %c0_6] : memref<128x128xf32, #tpu.memory_space<vmem>>, vector<128x128xf32>
    %cst_7 = arith.constant 0.000000e+00 : f32
    %7 = vector.broadcast %cst_7 : f32 to vector<8x128xf32>
    %8 = vector.extract_strided_slice %5 {offsets = [0, 0], sizes = [8, 128], strides = [1, 1]} : vector<64x128xf32> to vector<8x128xf32>
    %cst_8 = arith.constant dense<0.000000e+00> : vector<8x128xf32>
    %9 = tpu.matmul %7, %6, %cst_8 {dimension_numbers = #tpu.dot_dimension_numbers<[1], [0], [0], [1], [0, 0, 1, 1], [], []>} : vector<8x128xf32>, vector<128x128xf32>, vector<8x128xf32> -> vector<8x128xf32>
    %10 = arith.addf %8, %9 : vector<8x128xf32>
    %11 = math.tanh %10 : vector<8x128xf32>
    %12 = vector.extract_strided_slice %5 {offsets = [8, 0], sizes = [8, 128], strides = [1, 1]} : vector<64x128xf32> to vector<8x128xf32>
    %cst_9 = arith.constant dense<0.000000e+00> : vector<8x128xf32>
    %13 = tpu.matmul %11, %6, %cst_9 {dimension_numbers = #tpu.dot_dimension_numbers<[1], [0], [0], [1], [0, 0, 1, 1], [], []>} : vector<8x128xf32>, vector<128x128xf32>, vector<8x128xf32> -> vector<8x128xf32>
    %14 = arith.addf %12, %13 : vector<8x128xf32>
    %15 = math.tanh %14 : vector<8x128xf32>
    %16 = vector.extract_strided_slice %5 {offsets = [16, 0], sizes = [8, 128], strides = [1, 1]} : vector<64x128xf32> to vector<8x128xf32>
    %cst_10 = arith.constant dense<0.000000e+00> : vector<8x128xf32>
    %17 = tpu.matmul %15, %6, %cst_10 {dimension_numbers = #tpu.dot_dimension_numbers<[1], [0], [0], [1], [0, 0, 1, 1], [], []>} : vector<8x128xf32>, vector<128x128xf32>, vector<8x128xf32> -> vector<8x128xf32>
    %18 = arith.addf %16, %17 : vector<8x128xf32>
    %19 = math.tanh %18 : vector<8x128xf32>
    %20 = vector.extract_strided_slice %5 {offsets = [24, 0], sizes = [8, 128], strides = [1, 1]} : vector<64x128xf32> to vector<8x128xf32>
    %cst_11 = arith.constant dense<0.000000e+00> : vector<8x128xf32>
    %21 = tpu.matmul %19, %6, %cst_11 {dimension_numbers = #tpu.dot_dimension_numbers<[1], [0], [0], [1], [0, 0, 1, 1], [], []>} : vector<8x128xf32>, vector<128x128xf32>, vector<8x128xf32> -> vector<8x128xf32>
    %22 = arith.addf %20, %21 : vector<8x128xf32>
    %23 = math.tanh %22 : vector<8x128xf32>
    %24 = vector.extract_strided_slice %5 {offsets = [32, 0], sizes = [8, 128], strides = [1, 1]} : vector<64x128xf32> to vector<8x128xf32>
    %cst_12 = arith.constant dense<0.000000e+00> : vector<8x128xf32>
    %25 = tpu.matmul %23, %6, %cst_12 {dimension_numbers = #tpu.dot_dimension_numbers<[1], [0], [0], [1], [0, 0, 1, 1], [], []>} : vector<8x128xf32>, vector<128x128xf32>, vector<8x128xf32> -> vector<8x128xf32>
    %26 = arith.addf %24, %25 : vector<8x128xf32>
    %27 = math.tanh %26 : vector<8x128xf32>
    %28 = vector.extract_strided_slice %5 {offsets = [40, 0], sizes = [8, 128], strides = [1, 1]} : vector<64x128xf32> to vector<8x128xf32>
    %cst_13 = arith.constant dense<0.000000e+00> : vector<8x128xf32>
    %29 = tpu.matmul %27, %6, %cst_13 {dimension_numbers = #tpu.dot_dimension_numbers<[1], [0], [0], [1], [0, 0, 1, 1], [], []>} : vector<8x128xf32>, vector<128x128xf32>, vector<8x128xf32> -> vector<8x128xf32>
    %30 = arith.addf %28, %29 : vector<8x128xf32>
    %31 = math.tanh %30 : vector<8x128xf32>
    %32 = vector.extract_strided_slice %5 {offsets = [48, 0], sizes = [8, 128], strides = [1, 1]} : vector<64x128xf32> to vector<8x128xf32>
    %cst_14 = arith.constant dense<0.000000e+00> : vector<8x128xf32>
    %33 = tpu.matmul %31, %6, %cst_14 {dimension_numbers = #tpu.dot_dimension_numbers<[1], [0], [0], [1], [0, 0, 1, 1], [], []>} : vector<8x128xf32>, vector<128x128xf32>, vector<8x128xf32> -> vector<8x128xf32>
    %34 = arith.addf %32, %33 : vector<8x128xf32>
    %35 = math.tanh %34 : vector<8x128xf32>
    %36 = vector.extract_strided_slice %5 {offsets = [56, 0], sizes = [8, 128], strides = [1, 1]} : vector<64x128xf32> to vector<8x128xf32>
    %cst_15 = arith.constant dense<0.000000e+00> : vector<8x128xf32>
    %37 = tpu.matmul %35, %6, %cst_15 {dimension_numbers = #tpu.dot_dimension_numbers<[1], [0], [0], [1], [0, 0, 1, 1], [], []>} : vector<8x128xf32>, vector<128x128xf32>, vector<8x128xf32> -> vector<8x128xf32>
    %38 = arith.addf %36, %37 : vector<8x128xf32>
    %39 = math.tanh %38 : vector<8x128xf32>
    %40 = tpu.concatenate %11, %15, %19, %23, %27, %31, %35, %39 in 1 : vector<8x128xf32>, vector<8x128xf32>, vector<8x128xf32>, vector<8x128xf32>, vector<8x128xf32>, vector<8x128xf32>, vector<8x128xf32>, vector<8x128xf32> -> vector<8x1024xf32>
    %c0_16 = arith.constant 0 : index
    %c0_17 = arith.constant 0 : index
    %41 = vector.load %arg5[%c0_16, %c0_17] : memref<1024x8xf32, #tpu.memory_space<vmem>>, vector<1024x8xf32>
    %cst_18 = arith.constant dense<0.000000e+00> : vector<8x8xf32>
    %42 = tpu.matmul %40, %41, %cst_18 {dimension_numbers = #tpu.dot_dimension_numbers<[1], [0], [0], [1], [0, 0, 1, 1], [], []>} : vector<8x1024xf32>, vector<1024x8xf32>, vector<8x8xf32> -> vector<8x8xf32>
    %c0_19 = arith.constant 0 : index
    %c0_20 = arith.constant 0 : index
    %43 = vector.load %arg6[%c0_19, %c0_20] : memref<1x1xf32, #tpu.memory_space<vmem>>, vector<1x1xf32>
    %44 = vector.broadcast %43 : vector<1x1xf32> to vector<8x8xf32>
    %45 = arith.addf %42, %44 : vector<8x8xf32>
    %c0_21 = arith.constant 0 : index
    %c0_22 = arith.constant 0 : index
    %46 = vector.load %arg7[%c0_21, %c0_22] : memref<8x8xf32, #tpu.memory_space<vmem>>, vector<8x8xf32>
    tpu.vector_store %arg7[%c0_21, %c0_22], %45 {strides = array<i32>} : memref<8x8xf32, #tpu.memory_space<vmem>>, vector<8x8xf32>,
    return
  }
  func.func @transform_0(%arg0: i32) -> (i32, i32) {
    %c0_i32 = arith.constant 0 : i32
    %c0_i32_0 = arith.constant 0 : i32
    %c0_i32_1 = arith.constant 0 : i32
    return %c0_i32, %c0_i32_0 : i32, i32
  }
  func.func @transform_1(%arg0: i32) -> (i32, i32) {
    %c0_i32 = arith.constant 0 : i32
    %c0_i32_0 = arith.constant 0 : i32
    %c0_i32_1 = arith.constant 0 : i32
    return %c0_i32, %c0_i32_0 : i32, i32
  }
  func.func @transform_2(%arg0: i32) -> (i32, i32) {
    %c0_i32 = arith.constant 0 : i32
    %c0_i32_0 = arith.constant 0 : i32
    %c0_i32_1 = arith.constant 0 : i32
    return %c0_i32, %c0_i32_0 : i32, i32
  }
  func.func @transform_3(%arg0: i32) -> (i32, i32) {
    %c0_i32 = arith.constant 0 : i32
    %c0_i32_0 = arith.constant 0 : i32
    %c0_i32_1 = arith.constant 0 : i32
    return %c0_i32, %c0_i32_0 : i32, i32
  }
  func.func @transform_4(%arg0: i32) -> (i32, i32) {
    %c0_i32 = arith.constant 0 : i32
    %c0_i32_0 = arith.constant 0 : i32
    %c0_i32_1 = arith.constant 0 : i32
    return %c0_i32, %c0_i32_0 : i32, i32
  }
  func.func @transform_5(%arg0: i32) -> (i32, i32) {
    %c0_i32 = arith.constant 0 : i32
    %c0_i32_0 = arith.constant 0 : i32
    %c0_i32_1 = arith.constant 0 : i32
    return %c0_i32, %c0_i32_0 : i32, i32
  }
  func.func @transform_6(%arg0: i32) -> (i32, i32) {
    %c0_i32 = arith.constant 0 : i32
    %c0_i32_0 = arith.constant 0 : i32
    %c0_i32_1 = arith.constant 0 : i32
    return %c0_i32, %c0_i32_0 : i32, i32
  }
}

</mosaic_0001>

<llo_original>
// kernel: tpu_custom_call.1
$region0: #{tpu_custom_call.1}
  #allocation0 [shape = 'u32[]', space=smem, size = 0x4, offset = 0x4, fixed_abs, tag = 'smem constant byte address 0x4 - core index']
  #allocation1 [shape = 'u32[144,128]{1,0:T(1,128)}', space=vmem, size = 0x12000, scoped, tag = 'internal scratch']
  #allocation2 [shape = 'f32[1,1]{1,0:T(1,128)S(1)}', space=vmem, size = 0x200, scoped, tag = 'scoped memory for tpu_custom_call.1']
  %s0 = inlined_call_operand.vmem [shape: f32[64,4], index: 0, kind: input, shape index: {}]
  %s1 = inlined_call_operand.vmem [shape: f32[4,128], index: 1, kind: input, shape index: {}]
  %s2 = inlined_call_operand.vmem [shape: f32[128,128], index: 2, kind: input, shape index: {}]
  %s3 = inlined_call_operand.vmem [shape: f32[1,128], index: 3, kind: input, shape index: {}]
  %s4 = inlined_call_operand.vmem [shape: f32[1024,8], index: 4, kind: input, shape index: {}]
  %s5 = inlined_call_operand.<no memory space> [shape: f32[1,1], index: 5, kind: input, shape index: {}]
  %s6 = inlined_call_operand.hbm [shape: f32[8,8], index: 6, kind: output, shape index: {}]
  %s7 = sld [smem:[#allocation0]]
  $region34: #{tpu_custom_call.1} parent=0
    _
  %s9 = ssub.s32 1, %s7
  %s10 = scalar_select 0, %s9, %s7
  %v11 = vstv %s5
  %12 = vst [vmem:[#allocation2] sm:$0x1] %v11
  $region1: #{tpu_custom_call.1} parent=0
    #allocation3 [shape = 'u8[4096]{0}', space=vmem, size = 0x1000, scoped, tag = 'output window, operand 0, single buffered']
    #allocation4 [shape = 's32[1]{0}', space=sflag, size = 0x4, scoped, tag = 'scoped memory for tpu_custom_call.1']
    %13 = vsyncpa [#allocation4], 0
    // Predicated region
    $region2: #{tpu_custom_call.1} parent=1 // pred_check
      _
    $region3: #{tpu_custom_call.1} parent=1 // pred_check_branch
      %15 = sbr.rel (0) target = $region5
    $region4: #{tpu_custom_call.1} parent=1 // pred_region
      _
    $region5: #{tpu_custom_call.1} parent=1 // pred_fallthru
      _
    // Predicated region
    $region6: #{tpu_custom_call.1} parent=1 // pred_check
      _
    $region7: #{tpu_custom_call.1} parent=1 // pred_check_branch
      %17 = sbr.rel (0) target = $region9
    $region8: #{tpu_custom_call.1} parent=1 // pred_region
      _
    $region9: #{tpu_custom_call.1} parent=1 // pred_fallthru
      _
    // Predicated region
    $region10: #{tpu_custom_call.1} parent=1 // pred_check
      _
    $region11: #{tpu_custom_call.1} parent=1 // pred_check_branch
      %19 = sbr.rel (0) target = $region13
    $region12: #{tpu_custom_call.1} parent=1 // pred_region
      _
    $region13: #{tpu_custom_call.1} parent=1 // pred_fallthru
      _
    // Predicated region
    $region14: #{tpu_custom_call.1} parent=1 // pred_check
      _
    $region15: #{tpu_custom_call.1} parent=1 // pred_check_branch
      %21 = sbr.rel (0) target = $region17
    $region16: #{tpu_custom_call.1} parent=1 // pred_region
      _
    $region17: #{tpu_custom_call.1} parent=1 // pred_fallthru
      _
    // Predicated region
    $region18: #{tpu_custom_call.1} parent=1 // pred_check
      _
    $region19: #{tpu_custom_call.1} parent=1 // pred_check_branch
      %23 = sbr.rel (0) target = $region21
    $region20: #{tpu_custom_call.1} parent=1 // pred_region
      _
    $region21: #{tpu_custom_call.1} parent=1 // pred_fallthru
      _
    // Predicated region
    $region22: #{tpu_custom_call.1} parent=1 // pred_check
      _
    $region23: #{tpu_custom_call.1} parent=1 // pred_check_branch
      %25 = sbr.rel (0) target = $region25
    $region24: #{tpu_custom_call.1} parent=1 // pred_region
      _
    $region25: #{tpu_custom_call.1} parent=1 // pred_fallthru
      _
    %v26 = vld [vmem:[%s0] sm:$0xff]
    %v27 = vld [vmem:[%s0 + $0x8] sm:$0xff]
    %v28 = vld [vmem:[%s0 + $0x10] sm:$0xff]
    %v29 = vld [vmem:[%s0 + $0x18] sm:$0xff]
    %v30 = vld [vmem:[%s0 + $0x20] sm:$0xff]
    %v31 = vld [vmem:[%s0 + $0x28] sm:$0xff]
    %v32 = vld [vmem:[%s0 + $0x30] sm:$0xff]
    %v33 = vld [vmem:[%s0 + $0x38] sm:$0xff]
    %v34 = vld [vmem:[%s1] sm:$0xf]
    %v35 = vld [vmem:[%s3] sm:$0x1]
    %v37 = vlaneseq
    %v38 = vshrl.u32 %v37, 7
    %v39 = vsub.s32 0, %v38
    %v40 = vrot.slane %v35, %v39
    %vm42 = vcmask 31744
    %v44 = vsel %vm42, %v26, 0
    %v47 = vsel %vm42, %v27, 0
    %v50 = vsel %vm42, %v28, 0
    %v53 = vsel %vm42, %v29, 0
    %v56 = vsel %vm42, %v30, 0
    %v59 = vsel %vm42, %v31, 0
    %v62 = vsel %vm42, %v32, 0
    %v65 = vsel %vm42, %v33, 0
    %vm67 = vcmask 1043456
    %v69 = vsel %vm67, %v34, 0
    %71 = vmatprep.subr.mxu0 0.0
    %72 = vmatpush1.msra.mxu0 %v69
    %73 = vmatprep.subr.mxu0 0.0
    %74 = vmatpush1.msra.mxu0 0.0
    %75 = vmatprep.subr.mxu0 0.0
    %76 = vmatpush1.msra.mxu0 0.0
    %77 = vmatprep.subr.mxu0 0.0
    %78 = vmatpush1.msra.mxu0 0.0
    %79 = vmatprep.subr.mxu0 0.0
    %80 = vmatpush1.msra.mxu0 0.0
    %81 = vmatprep.subr.mxu0 0.0
    %82 = vmatpush1.msra.mxu0 0.0
    %83 = vmatprep.subr.mxu0 0.0
    %84 = vmatpush1.msra.mxu0 0.0
    %85 = vmatprep.subr.mxu0 0.0
    %86 = vmatpush1.msra.mxu0 0.0
    %87 = vmatprep.subr.mxu0 0.0
    %88 = vmatpush1.msra.mxu0 0.0
    %89 = vmatprep.subr.mxu0 0.0
    %90 = vmatpush1.msra.mxu0 0.0
    %91 = vmatprep.subr.mxu0 0.0
    %92 = vmatpush1.msra.mxu0 0.0
    %93 = vmatprep.subr.mxu0 0.0
    %94 = vmatpush1.msra.mxu0 0.0
    %95 = vmatprep.subr.mxu0 0.0
    %96 = vmatpush1.msra.mxu0 0.0
    %97 = vmatprep.subr.mxu0 0.0
    %98 = vmatpush1.msra.mxu0 0.0
    %99 = vmatprep.subr.mxu0 0.0
    %100 = vmatpush1.msra.mxu0 0.0
    %101 = vmatprep.subr.mxu0 0.0
    %102 = vmatpush1.msra.mxu0 0.0
    %103 = vmatprep.subr.mxu0 0.0
    %104 = vmatpush1.msra.mxu0 0.0
    %105 = vmatprep.subr.mxu0 0.0
    %106 = vmatpush1.msra.mxu0 0.0
    %107 = vmatprep.subr.mxu0 0.0
    %108 = vmatpush1.msra.mxu0 0.0
    %109 = vmatprep.subr.mxu0 0.0
    %110 = vmatpush1.msra.mxu0 0.0
    %111 = vmatprep.subr.mxu0 0.0
    %112 = vmatpush1.msra.mxu0 0.0
    %113 = vmatprep.subr.mxu0 0.0
    %114 = vmatpush1.msra.mxu0 0.0
    %115 = vmatprep.subr.mxu0 0.0
    %116 = vmatpush1.msra.mxu0 0.0
    %117 = vmatprep.subr.mxu0 0.0
    %118 = vmatpush1.msra.mxu0 0.0
    %119 = vmatprep.subr.mxu0 0.0
    %120 = vmatpush1.msra.mxu0 0.0
    %121 = vmatprep.subr.mxu0 0.0
    %122 = vmatpush1.msra.mxu0 0.0
    %123 = vmatprep.subr.mxu0 0.0
    %124 = vmatpush1.msra.mxu0 0.0
    %125 = vmatprep.subr.mxu0 0.0
    %126 = vmatpush1.msra.mxu0 0.0
    %127 = vmatprep.subr.mxu0 0.0
    %128 = vmatpush1.msra.mxu0 0.0
    %129 = vmatprep.subr.mxu0 0.0
    %130 = vmatpush1.msra.mxu0 0.0
    %131 = vmatprep.subr.mxu0 0.0
    %132 = vmatpush1.msra.mxu0 0.0
    %133 = vmatprep.subr.mxu0 0.0
    %134 = vmatpush1.msra.mxu0 0.0
    %135 = vmatprep.mubr.f32.mxu0 0.0
    %136 = vmatmul.mubr.f32.gmra.mrb[0].mxu0 %v44
    %v137 = vpop.f32.mrb[0].mxu0
    %v138 = vadd.f32 %v40, %v137
    %v139 = vpop.f32.mrb[0].mxu0
    %140 = vmatprep.mubr.f32.mxu0 0.0
    %141 = vmatmul.mubr.f32.gmra.mrb[0].mxu0 %v47
    %v142 = vpop.f32.mrb[0].mxu0
    %v143 = vadd.f32 %v40, %v142
    %v144 = vpop.f32.mrb[0].mxu0
    %145 = vmatprep.mubr.f32.mxu0 0.0
    %146 = vmatmul.mubr.f32.gmra.mrb[0].mxu0 %v50
    %v147 = vpop.f32.mrb[0].mxu0
    %v148 = vadd.f32 %v40, %v147
    %v149 = vpop.f32.mrb[0].mxu0
    %150 = vmatprep.mubr.f32.mxu0 0.0
    %151 = vmatmul.mubr.f32.gmra.mrb[0].mxu0 %v53
    %v152 = vpop.f32.mrb[0].mxu0
    %v153 = vadd.f32 %v40, %v152
    %v154 = vpop.f32.mrb[0].mxu0
    %155 = vmatprep.mubr.f32.mxu0 0.0
    %156 = vmatmul.mubr.f32.gmra.mrb[0].mxu0 %v56
    %v157 = vpop.f32.mrb[0].mxu0
    %v158 = vadd.f32 %v40, %v157
    %v159 = vpop.f32.mrb[0].mxu0
    %160 = vmatprep.mubr.f32.mxu0 0.0
    %161 = vmatmul.mubr.f32.gmra.mrb[0].mxu0 %v59
    %v162 = vpop.f32.mrb[0].mxu0
    %v163 = vadd.f32 %v40, %v162
    %v164 = vpop.f32.mrb[0].mxu0
    %165 = vmatprep.mubr.f32.mxu0 0.0
    %166 = vmatmul.mubr.f32.gmra.mrb[0].mxu0 %v62
    %v167 = vpop.f32.mrb[0].mxu0
    %v168 = vadd.f32 %v40, %v167
    %v169 = vpop.f32.mrb[0].mxu0
    %170 = vmatprep.mubr.f32.mxu0 0.0
    %171 = vmatmul.mubr.f32.gmra.mrb[0].mxu0 %v65
    %v172 = vpop.f32.mrb[0].mxu0
    %v173 = vadd.f32 %v40, %v172
    %v174 = vpop.f32.mrb[0].mxu0
    %175 = vdwg.mxu0
    %v176 = vld [vmem:[%s2] sm:$0xff]
    %v177 = vld [vmem:[%s2 + $0x8] sm:$0xff]
    %v178 = vld [vmem:[%s2 + $0x10] sm:$0xff]
    %v179 = vld [vmem:[%s2 + $0x18] sm:$0xff]
    %v180 = vld [vmem:[%s2 + $0x20] sm:$0xff]
    %v181 = vld [vmem:[%s2 + $0x28] sm:$0xff]
    %v182 = vld [vmem:[%s2 + $0x30] sm:$0xff]
    %v183 = vld [vmem:[%s2 + $0x38] sm:$0xff]
    %v184 = vld [vmem:[%s2 + $0x40] sm:$0xff]
    %v185 = vld [vmem:[%s2 + $0x48] sm:$0xff]
    %v186 = vld [vmem:[%s2 + $0x50] sm:$0xff]
    %v187 = vld [vmem:[%s2 + $0x58] sm:$0xff]
    %v188 = vld [vmem:[%s2 + $0x60] sm:$0xff]
    %v189 = vld [vmem:[%s2 + $0x68] sm:$0xff]
    %v190 = vld [vmem:[%s2 + $0x70] sm:$0xff]
    %v191 = vld [vmem:[%s2 + $0x78] sm:$0xff]
    %192 = vmatprep.subr.mxu0 0.0
    %193 = vmatpush1.msra.mxu0 %v176
    %194 = vmatprep.subr.mxu0 0.0
    %195 = vmatpush1.msra.mxu0 %v177
    %196 = vmatprep.subr.mxu0 0.0
    %197 = vmatpush1.msra.mxu0 %v178
    %198 = vmatprep.subr.mxu0 0.0
    %199 = vmatpush1.msra.mxu0 %v179
    %200 = vmatprep.subr.mxu0 0.0
    %201 = vmatpush1.msra.mxu0 %v180
    %202 = vmatprep.subr.mxu0 0.0
    %203 = vmatpush1.msra.mxu0 %v181
    %204 = vmatprep.subr.mxu0 0.0
    %205 = vmatpush1.msra.mxu0 %v182
    %206 = vmatprep.subr.mxu0 0.0
    %207 = vmatpush1.msra.mxu0 %v183
    %208 = vmatprep.subr.mxu0 0.0
    %209 = vmatpush1.msra.mxu0 %v184
    %210 = vmatprep.subr.mxu0 0.0
    %211 = vmatpush1.msra.mxu0 %v185
    %212 = vmatprep.subr.mxu0 0.0
    %213 = vmatpush1.msra.mxu0 %v186
    %214 = vmatprep.subr.mxu0 0.0
    %215 = vmatpush1.msra.mxu0 %v187
    %216 = vmatprep.subr.mxu0 0.0
    %217 = vmatpush1.msra.mxu0 %v188
    %218 = vmatprep.subr.mxu0 0.0
    %219 = vmatpush1.msra.mxu0 %v189
    %220 = vmatprep.subr.mxu0 0.0
    %221 = vmatpush1.msra.mxu0 %v190
    %222 = vmatprep.subr.mxu0 0.0
    %223 = vmatpush1.msra.mxu0 %v191
    %224 = vmatprep.subr.mxu0 0.0
    %225 = vmatpush1.msra.mxu0 0.0
    %226 = vmatprep.subr.mxu0 0.0
    %227 = vmatpush1.msra.mxu0 0.0
    %228 = vmatprep.subr.mxu0 0.0
    %229 = vmatpush1.msra.mxu0 0.0
    %230 = vmatprep.subr.mxu0 0.0
    %231 = vmatpush1.msra.mxu0 0.0
    %232 = vmatprep.subr.mxu0 0.0
    %233 = vmatpush1.msra.mxu0 0.0
    %234 = vmatprep.subr.mxu0 0.0
    %235 = vmatpush1.msra.mxu0 0.0
    %236 = vmatprep.subr.mxu0 0.0
    %237 = vmatpush1.msra.mxu0 0.0
    %238 = vmatprep.subr.mxu0 0.0
    %239 = vmatpush1.msra.mxu0 0.0
    %240 = vmatprep.subr.mxu0 0.0
    %241 = vmatpush1.msra.mxu0 0.0
    %242 = vmatprep.subr.mxu0 0.0
    %243 = vmatpush1.msra.mxu0 0.0
    %244 = vmatprep.subr.mxu0 0.0
    %245 = vmatpush1.msra.mxu0 0.0
    %246 = vmatprep.subr.mxu0 0.0
    %247 = vmatpush1.msra.mxu0 0.0
    %248 = vmatprep.subr.mxu0 0.0
    %249 = vmatpush1.msra.mxu0 0.0
    %250 = vmatprep.subr.mxu0 0.0
    %251 = vmatpush1.msra.mxu0 0.0
    %252 = vmatprep.subr.mxu0 0.0
    %253 = vmatpush1.msra.mxu0 0.0
    %254 = vmatprep.subr.mxu0 0.0
    %255 = vmatpush1.msra.mxu0 0.0
    %256 = vmatprep.mubr.f32.mxu0 0.0
    %257 = vmatmul.mubr.f32.gmra.mrb[0].mxu0 0.0
    %v258 = vpop.f32.mrb[0].mxu0
    %v259 = vadd.f32 0.0, %v258
    %v260 = vpop.f32.mrb[0].mxu0
    %261 = vdwg.mxu0
    %v262 = vadd.f32 %v138, %v259
    %v263 = vtanh.pop %v262
    %264 = vmatprep.subr.mxu0 0.0
    %265 = vmatpush1.msra.mxu0 %v176
    %266 = vmatprep.subr.mxu0 0.0
    %267 = vmatpush1.msra.mxu0 %v177
    %268 = vmatprep.subr.mxu0 0.0
    %269 = vmatpush1.msra.mxu0 %v178
    %270 = vmatprep.subr.mxu0 0.0
    %271 = vmatpush1.msra.mxu0 %v179
    %272 = vmatprep.subr.mxu0 0.0
    %273 = vmatpush1.msra.mxu0 %v180
    %274 = vmatprep.subr.mxu0 0.0
    %275 = vmatpush1.msra.mxu0 %v181
    %276 = vmatprep.subr.mxu0 0.0
    %277 = vmatpush1.msra.mxu0 %v182
    %278 = vmatprep.subr.mxu0 0.0
    %279 = vmatpush1.msra.mxu0 %v183
    %280 = vmatprep.subr.mxu0 0.0
    %281 = vmatpush1.msra.mxu0 %v184
    %282 = vmatprep.subr.mxu0 0.0
    %283 = vmatpush1.msra.mxu0 %v185
    %284 = vmatprep.subr.mxu0 0.0
    %285 = vmatpush1.msra.mxu0 %v186
    %286 = vmatprep.subr.mxu0 0.0
    %287 = vmatpush1.msra.mxu0 %v187
    %288 = vmatprep.subr.mxu0 0.0
    %289 = vmatpush1.msra.mxu0 %v188
    %290 = vmatprep.subr.mxu0 0.0
    %291 = vmatpush1.msra.mxu0 %v189
    %292 = vmatprep.subr.mxu0 0.0
    %293 = vmatpush1.msra.mxu0 %v190
    %294 = vmatprep.subr.mxu0 0.0
    %295 = vmatpush1.msra.mxu0 %v191
    %296 = vmatprep.subr.mxu0 0.0
    %297 = vmatpush1.msra.mxu0 0.0
    %298 = vmatprep.subr.mxu0 0.0
    %299 = vmatpush1.msra.mxu0 0.0
    %300 = vmatprep.subr.mxu0 0.0
    %301 = vmatpush1.msra.mxu0 0.0
    %302 = vmatprep.subr.mxu0 0.0
    %303 = vmatpush1.msra.mxu0 0.0
    %304 = vmatprep.subr.mxu0 0.0
    %305 = vmatpush1.msra.mxu0 0.0
    %306 = vmatprep.subr.mxu0 0.0
    %307 = vmatpush1.msra.mxu0 0.0
    %308 = vmatprep.subr.mxu0 0.0
    %309 = vmatpush1.msra.mxu0 0.0
    %310 = vmatprep.subr.mxu0 0.0
    %311 = vmatpush1.msra.mxu0 0.0
    %312 = vmatprep.subr.mxu0 0.0
    %313 = vmatpush1.msra.mxu0 0.0
    %314 = vmatprep.subr.mxu0 0.0
    %315 = vmatpush1.msra.mxu0 0.0
    %316 = vmatprep.subr.mxu0 0.0
    %317 = vmatpush1.msra.mxu0 0.0
    %318 = vmatprep.subr.mxu0 0.0
    %319 = vmatpush1.msra.mxu0 0.0
    %320 = vmatprep.subr.mxu0 0.0
    %321 = vmatpush1.msra.mxu0 0.0
    %322 = vmatprep.subr.mxu0 0.0
    %323 = vmatpush1.msra.mxu0 0.0
    %324 = vmatprep.subr.mxu0 0.0
    %325 = vmatpush1.msra.mxu0 0.0
    %326 = vmatprep.subr.mxu0 0.0
    %327 = vmatpush1.msra.mxu0 0.0
    %328 = vmatprep.mubr.f32.mxu0 0.0
    %329 = vmatmul.mubr.f32.gmra.mrb[0].mxu0 %v263
    %v330 = vpop.f32.mrb[0].mxu0
    %v331 = vadd.f32 0.0, %v330
    %v332 = vpop.f32.mrb[0].mxu0
    %333 = vdwg.mxu0
    %v334 = vadd.f32 %v143, %v331
    %v335 = vtanh.pop %v334
    %336 = vmatprep.subr.mxu0 0.0
    %337 = vmatpush1.msra.mxu0 %v176
    %338 = vmatprep.subr.mxu0 0.0
    %339 = vmatpush1.msra.mxu0 %v177
    %340 = vmatprep.subr.mxu0 0.0
    %341 = vmatpush1.msra.mxu0 %v178
    %342 = vmatprep.subr.mxu0 0.0
    %343 = vmatpush1.msra.mxu0 %v179
    %344 = vmatprep.subr.mxu0 0.0
    %345 = vmatpush1.msra.mxu0 %v180
    %346 = vmatprep.subr.mxu0 0.0
    %347 = vmatpush1.msra.mxu0 %v181
    %348 = vmatprep.subr.mxu0 0.0
    %349 = vmatpush1.msra.mxu0 %v182
    %350 = vmatprep.subr.mxu0 0.0
    %351 = vmatpush1.msra.mxu0 %v183
    %352 = vmatprep.subr.mxu0 0.0
    %353 = vmatpush1.msra.mxu0 %v184
    %354 = vmatprep.subr.mxu0 0.0
    %355 = vmatpush1.msra.mxu0 %v185
    %356 = vmatprep.subr.mxu0 0.0
    %357 = vmatpush1.msra.mxu0 %v186
    %358 = vmatprep.subr.mxu0 0.0
    %359 = vmatpush1.msra.mxu0 %v187
    %360 = vmatprep.subr.mxu0 0.0
    %361 = vmatpush1.msra.mxu0 %v188
    %362 = vmatprep.subr.mxu0 0.0
    %363 = vmatpush1.msra.mxu0 %v189
    %364 = vmatprep.subr.mxu0 0.0
    %365 = vmatpush1.msra.mxu0 %v190
    %366 = vmatprep.subr.mxu0 0.0
    %367 = vmatpush1.msra.mxu0 %v191
    %368 = vmatprep.subr.mxu0 0.0
    %369 = vmatpush1.msra.mxu0 0.0
    %370 = vmatprep.subr.mxu0 0.0
    %371 = vmatpush1.msra.mxu0 0.0
    %372 = vmatprep.subr.mxu0 0.0
    %373 = vmatpush1.msra.mxu0 0.0
    %374 = vmatprep.subr.mxu0 0.0
    %375 = vmatpush1.msra.mxu0 0.0
    %376 = vmatprep.subr.mxu0 0.0
    %377 = vmatpush1.msra.mxu0 0.0
    %378 = vmatprep.subr.mxu0 0.0
    %379 = vmatpush1.msra.mxu0 0.0
    %380 = vmatprep.subr.mxu0 0.0
    %381 = vmatpush1.msra.mxu0 0.0
    %382 = vmatprep.subr.mxu0 0.0
    %383 = vmatpush1.msra.mxu0 0.0
    %384 = vmatprep.subr.mxu0 0.0
    %385 = vmatpush1.msra.mxu0 0.0
    %386 = vmatprep.subr.mxu0 0.0
    %387 = vmatpush1.msra.mxu0 0.0
    %388 = vmatprep.subr.mxu0 0.0
    %389 = vmatpush1.msra.mxu0 0.0
    %390 = vmatprep.subr.mxu0 0.0
    %391 = vmatpush1.msra.mxu0 0.0
    %392 = vmatprep.subr.mxu0 0.0
    %393 = vmatpush1.msra.mxu0 0.0
    %394 = vmatprep.subr.mxu0 0.0
    %395 = vmatpush1.msra.mxu0 0.0
    %396 = vmatprep.subr.mxu0 0.0
    %397 = vmatpush1.msra.mxu0 0.0
    %398 = vmatprep.subr.mxu0 0.0
    %399 = vmatpush1.msra.mxu0 0.0
    %400 = vmatprep.mubr.f32.mxu0 0.0
    %401 = vmatmul.mubr.f32.gmra.mrb[0].mxu0 %v335
    %v402 = vpop.f32.mrb[0].mxu0
    %v403 = vadd.f32 0.0, %v402
    %v404 = vpop.f32.mrb[0].mxu0
    %405 = vdwg.mxu0
    %v406 = vadd.f32 %v148, %v403
    %v407 = vtanh.pop %v406
    %408 = vmatprep.subr.mxu0 0.0
    %409 = vmatpush1.msra.mxu0 %v176
    %410 = vmatprep.subr.mxu0 0.0
    %411 = vmatpush1.msra.mxu0 %v177
    %412 = vmatprep.subr.mxu0 0.0
    %413 = vmatpush1.msra.mxu0 %v178
    %414 = vmatprep.subr.mxu0 0.0
    %415 = vmatpush1.msra.mxu0 %v179
    %416 = vmatprep.subr.mxu0 0.0
    %417 = vmatpush1.msra.mxu0 %v180
    %418 = vmatprep.subr.mxu0 0.0
    %419 = vmatpush1.msra.mxu0 %v181
    %420 = vmatprep.subr.mxu0 0.0
    %421 = vmatpush1.msra.mxu0 %v182
    %422 = vmatprep.subr.mxu0 0.0
    %423 = vmatpush1.msra.mxu0 %v183
    %424 = vmatprep.subr.mxu0 0.0
    %425 = vmatpush1.msra.mxu0 %v184
    %426 = vmatprep.subr.mxu0 0.0
    %427 = vmatpush1.msra.mxu0 %v185
    %428 = vmatprep.subr.mxu0 0.0
    %429 = vmatpush1.msra.mxu0 %v186
    %430 = vmatprep.subr.mxu0 0.0
    %431 = vmatpush1.msra.mxu0 %v187
    %432 = vmatprep.subr.mxu0 0.0
    %433 = vmatpush1.msra.mxu0 %v188
    %434 = vmatprep.subr.mxu0 0.0
    %435 = vmatpush1.msra.mxu0 %v189
    %436 = vmatprep.subr.mxu0 0.0
    %437 = vmatpush1.msra.mxu0 %v190
    %438 = vmatprep.subr.mxu0 0.0
    %439 = vmatpush1.msra.mxu0 %v191
    %440 = vmatprep.subr.mxu0 0.0
    %441 = vmatpush1.msra.mxu0 0.0
    %442 = vmatprep.subr.mxu0 0.0
    %443 = vmatpush1.msra.mxu0 0.0
    %444 = vmatprep.subr.mxu0 0.0
    %445 = vmatpush1.msra.mxu0 0.0
    %446 = vmatprep.subr.mxu0 0.0
    %447 = vmatpush1.msra.mxu0 0.0
    %448 = vmatprep.subr.mxu0 0.0
    %449 = vmatpush1.msra.mxu0 0.0
    %450 = vmatprep.subr.mxu0 0.0
    %451 = vmatpush1.msra.mxu0 0.0
    %452 = vmatprep.subr.mxu0 0.0
    %453 = vmatpush1.msra.mxu0 0.0
    %454 = vmatprep.subr.mxu0 0.0
    %455 = vmatpush1.msra.mxu0 0.0
    %456 = vmatprep.subr.mxu0 0.0
    %457 = vmatpush1.msra.mxu0 0.0
    %458 = vmatprep.subr.mxu0 0.0
    %459 = vmatpush1.msra.mxu0 0.0
    %460 = vmatprep.subr.mxu0 0.0
    %461 = vmatpush1.msra.mxu0 0.0
    %462 = vmatprep.subr.mxu0 0.0
    %463 = vmatpush1.msra.mxu0 0.0
    %464 = vmatprep.subr.mxu0 0.0
    %465 = vmatpush1.msra.mxu0 0.0
    %466 = vmatprep.subr.mxu0 0.0
    %467 = vmatpush1.msra.mxu0 0.0
    %468 = vmatprep.subr.mxu0 0.0
    %469 = vmatpush1.msra.mxu0 0.0
    %470 = vmatprep.subr.mxu0 0.0
    %471 = vmatpush1.msra.mxu0 0.0
    %472 = vmatprep.mubr.f32.mxu0 0.0
    %473 = vmatmul.mubr.f32.gmra.mrb[0].mxu0 %v407
    %v474 = vpop.f32.mrb[0].mxu0
    %v475 = vadd.f32 0.0, %v474
    %v476 = vpop.f32.mrb[0].mxu0
    %477 = vdwg.mxu0
    %v478 = vadd.f32 %v153, %v475
    %v479 = vtanh.pop %v478
    %480 = vmatprep.subr.mxu0 0.0
    %481 = vmatpush1.msra.mxu0 %v176
    %482 = vmatprep.subr.mxu0 0.0
    %483 = vmatpush1.msra.mxu0 %v177
    %484 = vmatprep.subr.mxu0 0.0
    %485 = vmatpush1.msra.mxu0 %v178
    %486 = vmatprep.subr.mxu0 0.0
    %487 = vmatpush1.msra.mxu0 %v179
    %488 = vmatprep.subr.mxu0 0.0
    %489 = vmatpush1.msra.mxu0 %v180
    %490 = vmatprep.subr.mxu0 0.0
    %491 = vmatpush1.msra.mxu0 %v181
    %492 = vmatprep.subr.mxu0 0.0
    %493 = vmatpush1.msra.mxu0 %v182
    %494 = vmatprep.subr.mxu0 0.0
    %495 = vmatpush1.msra.mxu0 %v183
    %496 = vmatprep.subr.mxu0 0.0
    %497 = vmatpush1.msra.mxu0 %v184
    %498 = vmatprep.subr.mxu0 0.0
    %499 = vmatpush1.msra.mxu0 %v185
    %500 = vmatprep.subr.mxu0 0.0
    %501 = vmatpush1.msra.mxu0 %v186
    %502 = vmatprep.subr.mxu0 0.0
    %503 = vmatpush1.msra.mxu0 %v187
    %504 = vmatprep.subr.mxu0 0.0
    %505 = vmatpush1.msra.mxu0 %v188
    %506 = vmatprep.subr.mxu0 0.0
    %507 = vmatpush1.msra.mxu0 %v189
    %508 = vmatprep.subr.mxu0 0.0
    %509 = vmatpush1.msra.mxu0 %v190
    %510 = vmatprep.subr.mxu0 0.0
    %511 = vmatpush1.msra.mxu0 %v191
    %512 = vmatprep.subr.mxu0 0.0
    %513 = vmatpush1.msra.mxu0 0.0
    %514 = vmatprep.subr.mxu0 0.0
    %515 = vmatpush1.msra.mxu0 0.0
    %516 = vmatprep.subr.mxu0 0.0
    %517 = vmatpush1.msra.mxu0 0.0
    %518 = vmatprep.subr.mxu0 0.0
    %519 = vmatpush1.msra.mxu0 0.0
    %520 = vmatprep.subr.mxu0 0.0
    %521 = vmatpush1.msra.mxu0 0.0
    %522 = vmatprep.subr.mxu0 0.0
    %523 = vmatpush1.msra.mxu0 0.0
    %524 = vmatprep.subr.mxu0 0.0
    %525 = vmatpush1.msra.mxu0 0.0
    %526 = vmatprep.subr.mxu0 0.0
    %527 = vmatpush1.msra.mxu0 0.0
    %528 = vmatprep.subr.mxu0 0.0
    %529 = vmatpush1.msra.mxu0 0.0
    %530 = vmatprep.subr.mxu0 0.0
    %531 = vmatpush1.msra.mxu0 0.0
    %532 = vmatprep.subr.mxu0 0.0
    %533 = vmatpush1.msra.mxu0 0.0
    %534 = vmatprep.subr.mxu0 0.0
    %535 = vmatpush1.msra.mxu0 0.0
    %536 = vmatprep.subr.mxu0 0.0
    %537 = vmatpush1.msra.mxu0 0.0
    %538 = vmatprep.subr.mxu0 0.0
    %539 = vmatpush1.msra.mxu0 0.0
    %540 = vmatprep.subr.mxu0 0.0
    %541 = vmatpush1.msra.mxu0 0.0
    %542 = vmatprep.subr.mxu0 0.0
    %543 = vmatpush1.msra.mxu0 0.0
    %544 = vmatprep.mubr.f32.mxu0 0.0
    %545 = vmatmul.mubr.f32.gmra.mrb[0].mxu0 %v479
    %v546 = vpop.f32.mrb[0].mxu0
    %v547 = vadd.f32 0.0, %v546
    %v548 = vpop.f32.mrb[0].mxu0
    %549 = vdwg.mxu0
    %v550 = vadd.f32 %v158, %v547
    %v551 = vtanh.pop %v550
    %552 = vmatprep.subr.mxu0 0.0
    %553 = vmatpush1.msra.mxu0 %v176
    %554 = vmatprep.subr.mxu0 0.0
    %555 = vmatpush1.msra.mxu0 %v177
    %556 = vmatprep.subr.mxu0 0.0
    %557 = vmatpush1.msra.mxu0 %v178
    %558 = vmatprep.subr.mxu0 0.0
    %559 = vmatpush1.msra.mxu0 %v179
    %560 = vmatprep.subr.mxu0 0.0
    %561 = vmatpush1.msra.mxu0 %v180
    %562 = vmatprep.subr.mxu0 0.0
    %563 = vmatpush1.msra.mxu0 %v181
    %564 = vmatprep.subr.mxu0 0.0
    %565 = vmatpush1.msra.mxu0 %v182
    %566 = vmatprep.subr.mxu0 0.0
    %567 = vmatpush1.msra.mxu0 %v183
    %568 = vmatprep.subr.mxu0 0.0
    %569 = vmatpush1.msra.mxu0 %v184
    %570 = vmatprep.subr.mxu0 0.0
    %571 = vmatpush1.msra.mxu0 %v185
    %572 = vmatprep.subr.mxu0 0.0
    %573 = vmatpush1.msra.mxu0 %v186
    %574 = vmatprep.subr.mxu0 0.0
    %575 = vmatpush1.msra.mxu0 %v187
    %576 = vmatprep.subr.mxu0 0.0
    %577 = vmatpush1.msra.mxu0 %v188
    %578 = vmatprep.subr.mxu0 0.0
    %579 = vmatpush1.msra.mxu0 %v189
    %580 = vmatprep.subr.mxu0 0.0
    %581 = vmatpush1.msra.mxu0 %v190
    %582 = vmatprep.subr.mxu0 0.0
    %583 = vmatpush1.msra.mxu0 %v191
    %584 = vmatprep.subr.mxu0 0.0
    %585 = vmatpush1.msra.mxu0 0.0
    %586 = vmatprep.subr.mxu0 0.0
    %587 = vmatpush1.msra.mxu0 0.0
    %588 = vmatprep.subr.mxu0 0.0
    %589 = vmatpush1.msra.mxu0 0.0
    %590 = vmatprep.subr.mxu0 0.0
    %591 = vmatpush1.msra.mxu0 0.0
    %592 = vmatprep.subr.mxu0 0.0
    %593 = vmatpush1.msra.mxu0 0.0
    %594 = vmatprep.subr.mxu0 0.0
    %595 = vmatpush1.msra.mxu0 0.0
    %596 = vmatprep.subr.mxu0 0.0
    %597 = vmatpush1.msra.mxu0 0.0
    %598 = vmatprep.subr.mxu0 0.0
    %599 = vmatpush1.msra.mxu0 0.0
    %600 = vmatprep.subr.mxu0 0.0
    %601 = vmatpush1.msra.mxu0 0.0
    %602 = vmatprep.subr.mxu0 0.0
    %603 = vmatpush1.msra.mxu0 0.0
    %604 = vmatprep.subr.mxu0 0.0
    %605 = vmatpush1.msra.mxu0 0.0
    %606 = vmatprep.subr.mxu0 0.0
    %607 = vmatpush1.msra.mxu0 0.0
    %608 = vmatprep.subr.mxu0 0.0
    %609 = vmatpush1.msra.mxu0 0.0
    %610 = vmatprep.subr.mxu0 0.0
    %611 = vmatpush1.msra.mxu0 0.0
    %612 = vmatprep.subr.mxu0 0.0
    %613 = vmatpush1.msra.mxu0 0.0
    %614 = vmatprep.subr.mxu0 0.0
    %615 = vmatpush1.msra.mxu0 0.0
    %616 = vmatprep.mubr.f32.mxu0 0.0
    %617 = vmatmul.mubr.f32.gmra.mrb[0].mxu0 %v551
    %v618 = vpop.f32.mrb[0].mxu0
    %v619 = vadd.f32 0.0, %v618
    %v620 = vpop.f32.mrb[0].mxu0
    %621 = vdwg.mxu0
    %v622 = vadd.f32 %v163, %v619
    %v623 = vtanh.pop %v622
    %624 = vmatprep.subr.mxu0 0.0
    %625 = vmatpush1.msra.mxu0 %v176
    %626 = vmatprep.subr.mxu0 0.0
    %627 = vmatpush1.msra.mxu0 %v177
    %628 = vmatprep.subr.mxu0 0.0
    %629 = vmatpush1.msra.mxu0 %v178
    %630 = vmatprep.subr.mxu0 0.0
    %631 = vmatpush1.msra.mxu0 %v179
    %632 = vmatprep.subr.mxu0 0.0
    %633 = vmatpush1.msra.mxu0 %v180
    %634 = vmatprep.subr.mxu0 0.0
    %635 = vmatpush1.msra.mxu0 %v181
    %636 = vmatprep.subr.mxu0 0.0
    %637 = vmatpush1.msra.mxu0 %v182
    %638 = vmatprep.subr.mxu0 0.0
    %639 = vmatpush1.msra.mxu0 %v183
    %640 = vmatprep.subr.mxu0 0.0
    %641 = vmatpush1.msra.mxu0 %v184
    %642 = vmatprep.subr.mxu0 0.0
    %643 = vmatpush1.msra.mxu0 %v185
    %644 = vmatprep.subr.mxu0 0.0
    %645 = vmatpush1.msra.mxu0 %v186
    %646 = vmatprep.subr.mxu0 0.0
    %647 = vmatpush1.msra.mxu0 %v187
    %648 = vmatprep.subr.mxu0 0.0
    %649 = vmatpush1.msra.mxu0 %v188
    %650 = vmatprep.subr.mxu0 0.0
    %651 = vmatpush1.msra.mxu0 %v189
    %652 = vmatprep.subr.mxu0 0.0
    %653 = vmatpush1.msra.mxu0 %v190
    %654 = vmatprep.subr.mxu0 0.0
    %655 = vmatpush1.msra.mxu0 %v191
    %656 = vmatprep.subr.mxu0 0.0
    %657 = vmatpush1.msra.mxu0 0.0
    %658 = vmatprep.subr.mxu0 0.0
    %659 = vmatpush1.msra.mxu0 0.0
    %660 = vmatprep.subr.mxu0 0.0
    %661 = vmatpush1.msra.mxu0 0.0
    %662 = vmatprep.subr.mxu0 0.0
    %663 = vmatpush1.msra.mxu0 0.0
    %664 = vmatprep.subr.mxu0 0.0
    %665 = vmatpush1.msra.mxu0 0.0
    %666 = vmatprep.subr.mxu0 0.0
    %667 = vmatpush1.msra.mxu0 0.0
    %668 = vmatprep.subr.mxu0 0.0
    %669 = vmatpush1.msra.mxu0 0.0
    %670 = vmatprep.subr.mxu0 0.0
    %671 = vmatpush1.msra.mxu0 0.0
    %672 = vmatprep.subr.mxu0 0.0
    %673 = vmatpush1.msra.mxu0 0.0
    %674 = vmatprep.subr.mxu0 0.0
    %675 = vmatpush1.msra.mxu0 0.0
    %676 = vmatprep.subr.mxu0 0.0
    %677 = vmatpush1.msra.mxu0 0.0
    %678 = vmatprep.subr.mxu0 0.0
    %679 = vmatpush1.msra.mxu0 0.0
    %680 = vmatprep.subr.mxu0 0.0
    %681 = vmatpush1.msra.mxu0 0.0
    %682 = vmatprep.subr.mxu0 0.0
    %683 = vmatpush1.msra.mxu0 0.0
    %684 = vmatprep.subr.mxu0 0.0
    %685 = vmatpush1.msra.mxu0 0.0
    %686 = vmatprep.subr.mxu0 0.0
    %687 = vmatpush1.msra.mxu0 0.0
    %688 = vmatprep.mubr.f32.mxu0 0.0
    %689 = vmatmul.mubr.f32.gmra.mrb[0].mxu0 %v623
    %v690 = vpop.f32.mrb[0].mxu0
    %v691 = vadd.f32 0.0, %v690
    %v692 = vpop.f32.mrb[0].mxu0
    %693 = vdwg.mxu0
    %v694 = vadd.f32 %v168, %v691
    %v695 = vtanh.pop %v694
    %696 = vmatprep.subr.mxu0 0.0
    %697 = vmatpush1.msra.mxu0 %v176
    %698 = vmatprep.subr.mxu0 0.0
    %699 = vmatpush1.msra.mxu0 %v177
    %700 = vmatprep.subr.mxu0 0.0
    %701 = vmatpush1.msra.mxu0 %v178
    %702 = vmatprep.subr.mxu0 0.0
    %703 = vmatpush1.msra.mxu0 %v179
    %704 = vmatprep.subr.mxu0 0.0
    %705 = vmatpush1.msra.mxu0 %v180
    %706 = vmatprep.subr.mxu0 0.0
    %707 = vmatpush1.msra.mxu0 %v181
    %708 = vmatprep.subr.mxu0 0.0
    %709 = vmatpush1.msra.mxu0 %v182
    %710 = vmatprep.subr.mxu0 0.0
    %711 = vmatpush1.msra.mxu0 %v183
    %712 = vmatprep.subr.mxu0 0.0
    %713 = vmatpush1.msra.mxu0 %v184
    %714 = vmatprep.subr.mxu0 0.0
    %715 = vmatpush1.msra.mxu0 %v185
    %716 = vmatprep.subr.mxu0 0.0
    %717 = vmatpush1.msra.mxu0 %v186
    %718 = vmatprep.subr.mxu0 0.0
    %719 = vmatpush1.msra.mxu0 %v187
    %720 = vmatprep.subr.mxu0 0.0
    %721 = vmatpush1.msra.mxu0 %v188
    %722 = vmatprep.subr.mxu0 0.0
    %723 = vmatpush1.msra.mxu0 %v189
    %724 = vmatprep.subr.mxu0 0.0
    %725 = vmatpush1.msra.mxu0 %v190
    %726 = vmatprep.subr.mxu0 0.0
    %727 = vmatpush1.msra.mxu0 %v191
    %728 = vmatprep.subr.mxu0 0.0
    %729 = vmatpush1.msra.mxu0 0.0
    %730 = vmatprep.subr.mxu0 0.0
    %731 = vmatpush1.msra.mxu0 0.0
    %732 = vmatprep.subr.mxu0 0.0
    %733 = vmatpush1.msra.mxu0 0.0
    %734 = vmatprep.subr.mxu0 0.0
    %735 = vmatpush1.msra.mxu0 0.0
    %736 = vmatprep.subr.mxu0 0.0
    %737 = vmatpush1.msra.mxu0 0.0
    %738 = vmatprep.subr.mxu0 0.0
    %739 = vmatpush1.msra.mxu0 0.0
    %740 = vmatprep.subr.mxu0 0.0
    %741 = vmatpush1.msra.mxu0 0.0
    %742 = vmatprep.subr.mxu0 0.0
    %743 = vmatpush1.msra.mxu0 0.0
    %744 = vmatprep.subr.mxu0 0.0
    %745 = vmatpush1.msra.mxu0 0.0
    %746 = vmatprep.subr.mxu0 0.0
    %747 = vmatpush1.msra.mxu0 0.0
    %748 = vmatprep.subr.mxu0 0.0
    %749 = vmatpush1.msra.mxu0 0.0
    %750 = vmatprep.subr.mxu0 0.0
    %751 = vmatpush1.msra.mxu0 0.0
    %752 = vmatprep.subr.mxu0 0.0
    %753 = vmatpush1.msra.mxu0 0.0
    %754 = vmatprep.subr.mxu0 0.0
    %755 = vmatpush1.msra.mxu0 0.0
    %756 = vmatprep.subr.mxu0 0.0
    %757 = vmatpush1.msra.mxu0 0.0
    %758 = vmatprep.subr.mxu0 0.0
    %759 = vmatpush1.msra.mxu0 0.0
    %760 = vmatprep.mubr.f32.mxu0 0.0
    %761 = vmatmul.mubr.f32.gmra.mrb[0].mxu0 %v695
    %v762 = vpop.f32.mrb[0].mxu0
    %v763 = vadd.f32 0.0, %v762
    %v764 = vpop.f32.mrb[0].mxu0
    %765 = vdwg.mxu0
    %v766 = vadd.f32 %v173, %v763
    %v767 = vtanh.pop %v766
    %v768 = vld [vmem:[%s4] sm:$0xff]
    %v769 = vld [vmem:[%s4 + $0x8] sm:$0xff]
    %v770 = vld [vmem:[%s4 + $0x10] sm:$0xff]
    %v771 = vld [vmem:[%s4 + $0x18] sm:$0xff]
    %v772 = vld [vmem:[%s4 + $0x20] sm:$0xff]
    %v773 = vld [vmem:[%s4 + $0x28] sm:$0xff]
    %v774 = vld [vmem:[%s4 + $0x30] sm:$0xff]
    %v775 = vld [vmem:[%s4 + $0x38] sm:$0xff]
    %v776 = vld [vmem:[%s4 + $0x40] sm:$0xff]
    %v777 = vld [vmem:[%s4 + $0x48] sm:$0xff]
    %v778 = vld [vmem:[%s4 + $0x50] sm:$0xff]
    %v779 = vld [vmem:[%s4 + $0x58] sm:$0xff]
    %v780 = vld [vmem:[%s4 + $0x60] sm:$0xff]
    %v781 = vld [vmem:[%s4 + $0x68] sm:$0xff]
    %v782 = vld [vmem:[%s4 + $0x70] sm:$0xff]
    %v783 = vld [vmem:[%s4 + $0x78] sm:$0xff]
    %v784 = vld [vmem:[%s4 + $0x80] sm:$0xff]
    %v785 = vld [vmem:[%s4 + $0x88] sm:$0xff]
    %v786 = vld [vmem:[%s4 + $0x90] sm:$0xff]
    %v787 = vld [vmem:[%s4 + $0x98] sm:$0xff]
    %v788 = vld [vmem:[%s4 + $0xa0] sm:$0xff]
    %v789 = vld [vmem:[%s4 + $0xa8] sm:$0xff]
    %v790 = vld [vmem:[%s4 + $0xb0] sm:$0xff]
    %v791 = vld [vmem:[%s4 + $0xb8] sm:$0xff]
    %v792 = vld [vmem:[%s4 + $0xc0] sm:$0xff]
    %v793 = vld [vmem:[%s4 + $0xc8] sm:$0xff]
    %v794 = vld [vmem:[%s4 + $0xd0] sm:$0xff]
    %v795 = vld [vmem:[%s4 + $0xd8] sm:$0xff]
    %v796 = vld [vmem:[%s4 + $0xe0] sm:$0xff]
    %v797 = vld [vmem:[%s4 + $0xe8] sm:$0xff]
    %v798 = vld [vmem:[%s4 + $0xf0] sm:$0xff]
    %v799 = vld [vmem:[%s4 + $0xf8] sm:$0xff]
    %v800 = vld [vmem:[%s4 + $0x100] sm:$0xff]
    %v801 = vld [vmem:[%s4 + $0x108] sm:$0xff]
    %v802 = vld [vmem:[%s4 + $0x110] sm:$0xff]
    %v803 = vld [vmem:[%s4 + $0x118] sm:$0xff]
    %v804 = vld [vmem:[%s4 + $0x120] sm:$0xff]
    %v805 = vld [vmem:[%s4 + $0x128] sm:$0xff]
    %v806 = vld [vmem:[%s4 + $0x130] sm:$0xff]
    %v807 = vld [vmem:[%s4 + $0x138] sm:$0xff]
    %v808 = vld [vmem:[%s4 + $0x140] sm:$0xff]
    %v809 = vld [vmem:[%s4 + $0x148] sm:$0xff]
    %v810 = vld [vmem:[%s4 + $0x150] sm:$0xff]
    %v811 = vld [vmem:[%s4 + $0x158] sm:$0xff]
    %v812 = vld [vmem:[%s4 + $0x160] sm:$0xff]
    %v813 = vld [vmem:[%s4 + $0x168] sm:$0xff]
    %v814 = vld [vmem:[%s4 + $0x170] sm:$0xff]
    %v815 = vld [vmem:[%s4 + $0x178] sm:$0xff]
    %v816 = vld [vmem:[%s4 + $0x180] sm:$0xff]
    %v817 = vld [vmem:[%s4 + $0x188] sm:$0xff]
    %v818 = vld [vmem:[%s4 + $0x190] sm:$0xff]
    %v819 = vld [vmem:[%s4 + $0x198] sm:$0xff]
    %v820 = vld [vmem:[%s4 + $0x1a0] sm:$0xff]
    %v821 = vld [vmem:[%s4 + $0x1a8] sm:$0xff]
    %v822 = vld [vmem:[%s4 + $0x1b0] sm:$0xff]
    %v823 = vld [vmem:[%s4 + $0x1b8] sm:$0xff]
    %v824 = vld [vmem:[%s4 + $0x1c0] sm:$0xff]
    %v825 = vld [vmem:[%s4 + $0x1c8] sm:$0xff]
    %v826 = vld [vmem:[%s4 + $0x1d0] sm:$0xff]
    %v827 = vld [vmem:[%s4 + $0x1d8] sm:$0xff]
    %v828 = vld [vmem:[%s4 + $0x1e0] sm:$0xff]
    %v829 = vld [vmem:[%s4 + $0x1e8] sm:$0xff]
    %v830 = vld [vmem:[%s4 + $0x1f0] sm:$0xff]
    %v831 = vld [vmem:[%s4 + $0x1f8] sm:$0xff]
    %v832 = vld [vmem:[%s4 + $0x200] sm:$0xff]
    %v833 = vld [vmem:[%s4 + $0x208] sm:$0xff]
    %v834 = vld [vmem:[%s4 + $0x210] sm:$0xff]
    %v835 = vld [vmem:[%s4 + $0x218] sm:$0xff]
    %v836 = vld [vmem:[%s4 + $0x220] sm:$0xff]
    %v837 = vld [vmem:[%s4 + $0x228] sm:$0xff]
    %v838 = vld [vmem:[%s4 + $0x230] sm:$0xff]
    %v839 = vld [vmem:[%s4 + $0x238] sm:$0xff]
    %v840 = vld [vmem:[%s4 + $0x240] sm:$0xff]
    %v841 = vld [vmem:[%s4 + $0x248] sm:$0xff]
    %v842 = vld [vmem:[%s4 + $0x250] sm:$0xff]
    %v843 = vld [vmem:[%s4 + $0x258] sm:$0xff]
    %v844 = vld [vmem:[%s4 + $0x260] sm:$0xff]
    %v845 = vld [vmem:[%s4 + $0x268] sm:$0xff]
    %v846 = vld [vmem:[%s4 + $0x270] sm:$0xff]
    %v847 = vld [vmem:[%s4 + $0x278] sm:$0xff]
    %v848 = vld [vmem:[%s4 + $0x280] sm:$0xff]
    %v849 = vld [vmem:[%s4 + $0x288] sm:$0xff]
    %v850 = vld [vmem:[%s4 + $0x290] sm:$0xff]
    %v851 = vld [vmem:[%s4 + $0x298] sm:$0xff]
    %v852 = vld [vmem:[%s4 + $0x2a0] sm:$0xff]
    %v853 = vld [vmem:[%s4 + $0x2a8] sm:$0xff]
    %v854 = vld [vmem:[%s4 + $0x2b0] sm:$0xff]
    %v855 = vld [vmem:[%s4 + $0x2b8] sm:$0xff]
    %v856 = vld [vmem:[%s4 + $0x2c0] sm:$0xff]
    %v857 = vld [vmem:[%s4 + $0x2c8] sm:$0xff]
    %v858 = vld [vmem:[%s4 + $0x2d0] sm:$0xff]
    %v859 = vld [vmem:[%s4 + $0x2d8] sm:$0xff]
    %v860 = vld [vmem:[%s4 + $0x2e0] sm:$0xff]
    %v861 = vld [vmem:[%s4 + $0x2e8] sm:$0xff]
    %v862 = vld [vmem:[%s4 + $0x2f0] sm:$0xff]
    %v863 = vld [vmem:[%s4 + $0x2f8] sm:$0xff]
    %v864 = vld [vmem:[%s4 + $0x300] sm:$0xff]
    %v865 = vld [vmem:[%s4 + $0x308] sm:$0xff]
    %v866 = vld [vmem:[%s4 + $0x310] sm:$0xff]
    %v867 = vld [vmem:[%s4 + $0x318] sm:$0xff]
    %v868 = vld [vmem:[%s4 + $0x320] sm:$0xff]
    %v869 = vld [vmem:[%s4 + $0x328] sm:$0xff]
    %v870 = vld [vmem:[%s4 + $0x330] sm:$0xff]
    %v871 = vld [vmem:[%s4 + $0x338] sm:$0xff]
    %v872 = vld [vmem:[%s4 + $0x340] sm:$0xff]
    %v873 = vld [vmem:[%s4 + $0x348] sm:$0xff]
    %v874 = vld [vmem:[%s4 + $0x350] sm:$0xff]
    %v875 = vld [vmem:[%s4 + $0x358] sm:$0xff]
    %v876 = vld [vmem:[%s4 + $0x360] sm:$0xff]
    %v877 = vld [vmem:[%s4 + $0x368] sm:$0xff]
    %v878 = vld [vmem:[%s4 + $0x370] sm:$0xff]
    %v879 = vld [vmem:[%s4 + $0x378] sm:$0xff]
    %v880 = vld [vmem:[%s4 + $0x380] sm:$0xff]
    %v881 = vld [vmem:[%s4 + $0x388] sm:$0xff]
    %v882 = vld [vmem:[%s4 + $0x390] sm:$0xff]
    %v883 = vld [vmem:[%s4 + $0x398] sm:$0xff]
    %v884 = vld [vmem:[%s4 + $0x3a0] sm:$0xff]
    %v885 = vld [vmem:[%s4 + $0x3a8] sm:$0xff]
    %v886 = vld [vmem:[%s4 + $0x3b0] sm:$0xff]
    %v887 = vld [vmem:[%s4 + $0x3b8] sm:$0xff]
    %v888 = vld [vmem:[%s4 + $0x3c0] sm:$0xff]
    %v889 = vld [vmem:[%s4 + $0x3c8] sm:$0xff]
    %v890 = vld [vmem:[%s4 + $0x3d0] sm:$0xff]
    %v891 = vld [vmem:[%s4 + $0x3d8] sm:$0xff]
    %v892 = vld [vmem:[%s4 + $0x3e0] sm:$0xff]
    %v893 = vld [vmem:[%s4 + $0x3e8] sm:$0xff]
    %v894 = vld [vmem:[%s4 + $0x3f0] sm:$0xff]
    %v895 = vld [vmem:[%s4 + $0x3f8] sm:$0xff]
    %v896 = vld [vmem:[#allocation2] sm:$0x1]
    %v898 = vlaneseq
    %v899 = vshrl.u32 %v898, 7
    %v900 = vsub.s32 0, %v899
    %v901 = vrot.slane %v896, %v900
    %902 = vset.pattern.permute.xlu0 0
    %903 = vperm.xlu0 %902, %v901
    %v904 = vpop.permute.xlu0 %903
    %906 = vmatprep.subr.mxu0 0.0
    %907 = vmatpush1.msra.mxu0 %v768
    %908 = vmatprep.subr.mxu0 0.0
    %909 = vmatpush1.msra.mxu0 %v769
    %910 = vmatprep.subr.mxu0 0.0
    %911 = vmatpush1.msra.mxu0 %v770
    %912 = vmatprep.subr.mxu0 0.0
    %913 = vmatpush1.msra.mxu0 %v771
    %914 = vmatprep.subr.mxu0 0.0
    %915 = vmatpush1.msra.mxu0 %v772
    %916 = vmatprep.subr.mxu0 0.0
    %917 = vmatpush1.msra.mxu0 %v773
    %918 = vmatprep.subr.mxu0 0.0
    %919 = vmatpush1.msra.mxu0 %v774
    %920 = vmatprep.subr.mxu0 0.0
    %921 = vmatpush1.msra.mxu0 %v775
    %922 = vmatprep.subr.mxu0 0.0
    %923 = vmatpush1.msra.mxu0 %v776
    %924 = vmatprep.subr.mxu0 0.0
    %925 = vmatpush1.msra.mxu0 %v777
    %926 = vmatprep.subr.mxu0 0.0
    %927 = vmatpush1.msra.mxu0 %v778
    %928 = vmatprep.subr.mxu0 0.0
    %929 = vmatpush1.msra.mxu0 %v779
    %930 = vmatprep.subr.mxu0 0.0
    %931 = vmatpush1.msra.mxu0 %v780
    %932 = vmatprep.subr.mxu0 0.0
    %933 = vmatpush1.msra.mxu0 %v781
    %934 = vmatprep.subr.mxu0 0.0
    %935 = vmatpush1.msra.mxu0 %v782
    %936 = vmatprep.subr.mxu0 0.0
    %937 = vmatpush1.msra.mxu0 %v783
    %938 = vmatprep.subr.mxu0 0.0
    %939 = vmatpush1.msra.mxu0 %v784
    %940 = vmatprep.subr.mxu0 0.0
    %941 = vmatpush1.msra.mxu0 %v785
    %942 = vmatprep.subr.mxu0 0.0
    %943 = vmatpush1.msra.mxu0 %v786
    %944 = vmatprep.subr.mxu0 0.0
    %945 = vmatpush1.msra.mxu0 %v787
    %946 = vmatprep.subr.mxu0 0.0
    %947 = vmatpush1.msra.mxu0 %v788
    %948 = vmatprep.subr.mxu0 0.0
    %949 = vmatpush1.msra.mxu0 %v789
    %950 = vmatprep.subr.mxu0 0.0
    %951 = vmatpush1.msra.mxu0 %v790
    %952 = vmatprep.subr.mxu0 0.0
    %953 = vmatpush1.msra.mxu0 %v791
    %954 = vmatprep.subr.mxu0 0.0
    %955 = vmatpush1.msra.mxu0 %v792
    %956 = vmatprep.subr.mxu0 0.0
    %957 = vmatpush1.msra.mxu0 %v793
    %958 = vmatprep.subr.mxu0 0.0
    %959 = vmatpush1.msra.mxu0 %v794
    %960 = vmatprep.subr.mxu0 0.0
    %961 = vmatpush1.msra.mxu0 %v795
    %962 = vmatprep.subr.mxu0 0.0
    %963 = vmatpush1.msra.mxu0 %v796
    %964 = vmatprep.subr.mxu0 0.0
    %965 = vmatpush1.msra.mxu0 %v797
    %966 = vmatprep.subr.mxu0 0.0
    %967 = vmatpush1.msra.mxu0 %v798
    %968 = vmatprep.subr.mxu0 0.0
    %969 = vmatpush1.msra.mxu0 %v799
    %970 = vmatprep.mubr.f32.mxu0 %v335
    %971 = vmatmul.mubr.f32.gmra.mrb[0].mxu0 %v263
    %v972 = vpop.f32.mrb[0].mxu0
    %v973 = vadd.f32 %v904, %v972
    %v974 = vpop.f32.mrb[0].mxu0
    %975 = vdwg.mxu0
    %976 = vmatprep.subr.mxu0 0.0
    %977 = vmatpush1.msra.mxu0 %v800
    %978 = vmatprep.subr.mxu0 0.0
    %979 = vmatpush1.msra.mxu0 %v801
    %980 = vmatprep.subr.mxu0 0.0
    %981 = vmatpush1.msra.mxu0 %v802
    %982 = vmatprep.subr.mxu0 0.0
    %983 = vmatpush1.msra.mxu0 %v803
    %984 = vmatprep.subr.mxu0 0.0
    %985 = vmatpush1.msra.mxu0 %v804
    %986 = vmatprep.subr.mxu0 0.0
    %987 = vmatpush1.msra.mxu0 %v805
    %988 = vmatprep.subr.mxu0 0.0
    %989 = vmatpush1.msra.mxu0 %v806
    %990 = vmatprep.subr.mxu0 0.0
    %991 = vmatpush1.msra.mxu0 %v807
    %992 = vmatprep.subr.mxu0 0.0
    %993 = vmatpush1.msra.mxu0 %v808
    %994 = vmatprep.subr.mxu0 0.0
    %995 = vmatpush1.msra.mxu0 %v809
    %996 = vmatprep.subr.mxu0 0.0
    %997 = vmatpush1.msra.mxu0 %v810
    %998 = vmatprep.subr.mxu0 0.0
    %999 = vmatpush1.msra.mxu0 %v811
    %1000 = vmatprep.subr.mxu0 0.0
    %1001 = vmatpush1.msra.mxu0 %v812
    %1002 = vmatprep.subr.mxu0 0.0
    %1003 = vmatpush1.msra.mxu0 %v813
    %1004 = vmatprep.subr.mxu0 0.0
    %1005 = vmatpush1.msra.mxu0 %v814
    %1006 = vmatprep.subr.mxu0 0.0
    %1007 = vmatpush1.msra.mxu0 %v815
    %1008 = vmatprep.subr.mxu0 0.0
    %1009 = vmatpush1.msra.mxu0 %v816
    %1010 = vmatprep.subr.mxu0 0.0
    %1011 = vmatpush1.msra.mxu0 %v817
    %1012 = vmatprep.subr.mxu0 0.0
    %1013 = vmatpush1.msra.mxu0 %v818
    %1014 = vmatprep.subr.mxu0 0.0
    %1015 = vmatpush1.msra.mxu0 %v819
    %1016 = vmatprep.subr.mxu0 0.0
    %1017 = vmatpush1.msra.mxu0 %v820
    %1018 = vmatprep.subr.mxu0 0.0
    %1019 = vmatpush1.msra.mxu0 %v821
    %1020 = vmatprep.subr.mxu0 0.0
    %1021 = vmatpush1.msra.mxu0 %v822
    %1022 = vmatprep.subr.mxu0 0.0
    %1023 = vmatpush1.msra.mxu0 %v823
    %1024 = vmatprep.subr.mxu0 0.0
    %1025 = vmatpush1.msra.mxu0 %v824
    %1026 = vmatprep.subr.mxu0 0.0
    %1027 = vmatpush1.msra.mxu0 %v825
    %1028 = vmatprep.subr.mxu0 0.0
    %1029 = vmatpush1.msra.mxu0 %v826
    %1030 = vmatprep.subr.mxu0 0.0
    %1031 = vmatpush1.msra.mxu0 %v827
    %1032 = vmatprep.subr.mxu0 0.0
    %1033 = vmatpush1.msra.mxu0 %v828
    %1034 = vmatprep.subr.mxu0 0.0
    %1035 = vmatpush1.msra.mxu0 %v829
    %1036 = vmatprep.subr.mxu0 0.0
    %1037 = vmatpush1.msra.mxu0 %v830
    %1038 = vmatprep.subr.mxu0 0.0
    %1039 = vmatpush1.msra.mxu0 %v831
    %1040 = vmatprep.mubr.f32.mxu0 %v479
    %1041 = vmatmul.mubr.f32.gmra.mrb[0].mxu0 %v407
    %v1042 = vpop.f32.mrb[0].mxu0
    %v1043 = vadd.f32 %v973, %v1042
    %v1044 = vpop.f32.mrb[0].mxu0
    %1045 = vdwg.mxu0
    %1046 = vmatprep.subr.mxu0 0.0
    %1047 = vmatpush1.msra.mxu0 %v832
    %1048 = vmatprep.subr.mxu0 0.0
    %1049 = vmatpush1.msra.mxu0 %v833
    %1050 = vmatprep.subr.mxu0 0.0
    %1051 = vmatpush1.msra.mxu0 %v834
    %1052 = vmatprep.subr.mxu0 0.0
    %1053 = vmatpush1.msra.mxu0 %v835
    %1054 = vmatprep.subr.mxu0 0.0
    %1055 = vmatpush1.msra.mxu0 %v836
    %1056 = vmatprep.subr.mxu0 0.0
    %1057 = vmatpush1.msra.mxu0 %v837
    %1058 = vmatprep.subr.mxu0 0.0
    %1059 = vmatpush1.msra.mxu0 %v838
    %1060 = vmatprep.subr.mxu0 0.0
    %1061 = vmatpush1.msra.mxu0 %v839
    %1062 = vmatprep.subr.mxu0 0.0
    %1063 = vmatpush1.msra.mxu0 %v840
    %1064 = vmatprep.subr.mxu0 0.0
    %1065 = vmatpush1.msra.mxu0 %v841
    %1066 = vmatprep.subr.mxu0 0.0
    %1067 = vmatpush1.msra.mxu0 %v842
    %1068 = vmatprep.subr.mxu0 0.0
    %1069 = vmatpush1.msra.mxu0 %v843
    %1070 = vmatprep.subr.mxu0 0.0
    %1071 = vmatpush1.msra.mxu0 %v844
    %1072 = vmatprep.subr.mxu0 0.0
    %1073 = vmatpush1.msra.mxu0 %v845
    %1074 = vmatprep.subr.mxu0 0.0
    %1075 = vmatpush1.msra.mxu0 %v846
    %1076 = vmatprep.subr.mxu0 0.0
    %1077 = vmatpush1.msra.mxu0 %v847
    %1078 = vmatprep.subr.mxu0 0.0
    %1079 = vmatpush1.msra.mxu0 %v848
    %1080 = vmatprep.subr.mxu0 0.0
    %1081 = vmatpush1.msra.mxu0 %v849
    %1082 = vmatprep.subr.mxu0 0.0
    %1083 = vmatpush1.msra.mxu0 %v850
    %1084 = vmatprep.subr.mxu0 0.0
    %1085 = vmatpush1.msra.mxu0 %v851
    %1086 = vmatprep.subr.mxu0 0.0
    %1087 = vmatpush1.msra.mxu0 %v852
    %1088 = vmatprep.subr.mxu0 0.0
    %1089 = vmatpush1.msra.mxu0 %v853
    %1090 = vmatprep.subr.mxu0 0.0
    %1091 = vmatpush1.msra.mxu0 %v854
    %1092 = vmatprep.subr.mxu0 0.0
    %1093 = vmatpush1.msra.mxu0 %v855
    %1094 = vmatprep.subr.mxu0 0.0
    %1095 = vmatpush1.msra.mxu0 %v856
    %1096 = vmatprep.subr.mxu0 0.0
    %1097 = vmatpush1.msra.mxu0 %v857
    %1098 = vmatprep.subr.mxu0 0.0
    %1099 = vmatpush1.msra.mxu0 %v858
    %1100 = vmatprep.subr.mxu0 0.0
    %1101 = vmatpush1.msra.mxu0 %v859
    %1102 = vmatprep.subr.mxu0 0.0
    %1103 = vmatpush1.msra.mxu0 %v860
    %1104 = vmatprep.subr.mxu0 0.0
    %1105 = vmatpush1.msra.mxu0 %v861
    %1106 = vmatprep.subr.mxu0 0.0
    %1107 = vmatpush1.msra.mxu0 %v862
    %1108 = vmatprep.subr.mxu0 0.0
    %1109 = vmatpush1.msra.mxu0 %v863
    %1110 = vmatprep.mubr.f32.mxu0 %v623
    %1111 = vmatmul.mubr.f32.gmra.mrb[0].mxu0 %v551
    %v1112 = vpop.f32.mrb[0].mxu0
    %v1113 = vadd.f32 %v1043, %v1112
    %v1114 = vpop.f32.mrb[0].mxu0
    %1115 = vdwg.mxu0
    %1116 = vmatprep.subr.mxu0 0.0
    %1117 = vmatpush1.msra.mxu0 %v864
    %1118 = vmatprep.subr.mxu0 0.0
    %1119 = vmatpush1.msra.mxu0 %v865
    %1120 = vmatprep.subr.mxu0 0.0
    %1121 = vmatpush1.msra.mxu0 %v866
    %1122 = vmatprep.subr.mxu0 0.0
    %1123 = vmatpush1.msra.mxu0 %v867
    %1124 = vmatprep.subr.mxu0 0.0
    %1125 = vmatpush1.msra.mxu0 %v868
    %1126 = vmatprep.subr.mxu0 0.0
    %1127 = vmatpush1.msra.mxu0 %v869
    %1128 = vmatprep.subr.mxu0 0.0
    %1129 = vmatpush1.msra.mxu0 %v870
    %1130 = vmatprep.subr.mxu0 0.0
    %1131 = vmatpush1.msra.mxu0 %v871
    %1132 = vmatprep.subr.mxu0 0.0
    %1133 = vmatpush1.msra.mxu0 %v872
    %1134 = vmatprep.subr.mxu0 0.0
    %1135 = vmatpush1.msra.mxu0 %v873
    %1136 = vmatprep.subr.mxu0 0.0
    %1137 = vmatpush1.msra.mxu0 %v874
    %1138 = vmatprep.subr.mxu0 0.0
    %1139 = vmatpush1.msra.mxu0 %v875
    %1140 = vmatprep.subr.mxu0 0.0
    %1141 = vmatpush1.msra.mxu0 %v876
    %1142 = vmatprep.subr.mxu0 0.0
    %1143 = vmatpush1.msra.mxu0 %v877
    %1144 = vmatprep.subr.mxu0 0.0
    %1145 = vmatpush1.msra.mxu0 %v878
    %1146 = vmatprep.subr.mxu0 0.0
    %1147 = vmatpush1.msra.mxu0 %v879
    %1148 = vmatprep.subr.mxu0 0.0
    %1149 = vmatpush1.msra.mxu0 %v880
    %1150 = vmatprep.subr.mxu0 0.0
    %1151 = vmatpush1.msra.mxu0 %v881
    %1152 = vmatprep.subr.mxu0 0.0
    %1153 = vmatpush1.msra.mxu0 %v882
    %1154 = vmatprep.subr.mxu0 0.0
    %1155 = vmatpush1.msra.mxu0 %v883
    %1156 = vmatprep.subr.mxu0 0.0
    %1157 = vmatpush1.msra.mxu0 %v884
    %1158 = vmatprep.subr.mxu0 0.0
    %1159 = vmatpush1.msra.mxu0 %v885
    %1160 = vmatprep.subr.mxu0 0.0
    %1161 = vmatpush1.msra.mxu0 %v886
    %1162 = vmatprep.subr.mxu0 0.0
    %1163 = vmatpush1.msra.mxu0 %v887
    %1164 = vmatprep.subr.mxu0 0.0
    %1165 = vmatpush1.msra.mxu0 %v888
    %1166 = vmatprep.subr.mxu0 0.0
    %1167 = vmatpush1.msra.mxu0 %v889
    %1168 = vmatprep.subr.mxu0 0.0
    %1169 = vmatpush1.msra.mxu0 %v890
    %1170 = vmatprep.subr.mxu0 0.0
    %1171 = vmatpush1.msra.mxu0 %v891
    %1172 = vmatprep.subr.mxu0 0.0
    %1173 = vmatpush1.msra.mxu0 %v892
    %1174 = vmatprep.subr.mxu0 0.0
    %1175 = vmatpush1.msra.mxu0 %v893
    %1176 = vmatprep.subr.mxu0 0.0
    %1177 = vmatpush1.msra.mxu0 %v894
    %1178 = vmatprep.subr.mxu0 0.0
    %1179 = vmatpush1.msra.mxu0 %v895
    %1180 = vmatprep.mubr.f32.mxu0 %v767
    %1181 = vmatmul.mubr.f32.gmra.mrb[0].mxu0 %v695
    %v1182 = vpop.f32.mrb[0].mxu0
    %v1183 = vadd.f32 %v1113, %v1182
    %v1184 = vpop.f32.mrb[0].mxu0
    %1185 = vdwg.mxu0
    %vm1186 = vcmask 64512
    %1187 = vst.msk [vmem:[#allocation3] sm:$0xff] %vm1186, %v1183
    // Predicated region
    $region26: #{tpu_custom_call.1} parent=1 // pred_check
      _
    $region27: #{tpu_custom_call.1} parent=1 // pred_check_branch
      %1189 = sbr.rel (0) target = $region29
    $region28: #{tpu_custom_call.1} parent=1 // pred_region
      %s1191 = ssub.s32 128, 128
      %1192 = vsyncadd [#allocation4], %s1191
      %s1194 = sshll.u32 [#allocation3], 4
      %s1195 = int_to_ptr.vmem [resolvable:$true] %s1194
      %1197 = dma.vmem_to_hbm [thread:$0]  %s1195, 128, %s6, [#allocation4]
    $region29: #{tpu_custom_call.1} parent=1 // pred_fallthru
      _
    // Predicated region
    $region30: #{tpu_custom_call.1} parent=1 // pred_check
      _
    $region31: #{tpu_custom_call.1} parent=1 // pred_check_branch
      %1199 = sbr.rel (0) target = $region33
    $region32: #{tpu_custom_call.1} parent=1 // pred_region
      %1200 = dma.done [#allocation4], 128
    $region33: #{tpu_custom_call.1} parent=1 // pred_fallthru
      _
    %1201 = vsyncpa [#allocation4], 1

</llo_original>
